<compile_context>
chip_gen: v7x
topology: tpu7x:2x2x1
jax: 0.10.0
libtpu: 0.0.40
codegen_flags: <defaults>
</compile_context>

<pallas_src>
import functools

import jax
import jax.numpy as jnp
from jax.experimental import pallas as pl
from jax.experimental.pallas import tpu as pltpu


_PAD_VALUE = -1.0e4            # exp(s * _PAD_VALUE) == 0.0 exactly in f32 for s ~ 30
_BLOCK_BYTES = 8 * 1024 * 1024  # ~85% of HBM roofline is reached by ~4 MiB blocks


def _round_up(a, b):
    return (a + b - 1) // b * b


def _vmem_capacity_bytes():
    try:
        return pltpu.get_tpu_info().vmem_capacity_bytes
    except Exception:
        return None


def _select_tiles(n, c, itemsize, block_rows=None, block_cols=None):
    """Byte-sized tiles; generation-aware row tiling for megacore sharding."""
    n8 = _round_up(max(int(n), 1), 8)
    c128 = _round_up(max(int(c), 1), 128)

    vmem = _vmem_capacity_bytes()
    two_tensorcores = vmem is not None and vmem < 96 * 1024 * 1024  # v7x heuristic

    if block_rows is not None:
        tm = min(int(block_rows), n8)
    else:
        tm = min(256, n8)
        # v7x: keep >= 2 tiles on the "parallel" row axis so both TCs run.
        if two_tensorcores and n8 >= 16 and n8 <= tm:
            tm = _round_up(n8 // 2, 8)
    tm = max(8, _round_up(tm, 8))

    if block_cols is not None:
        tc = min(int(block_cols), c128)
    else:
        # Budget the class tile in bytes (bf16 gets 2x the columns of f32);
        # take the full padded row when it fits, collapsing the class axis.
        tc_budget = max(128, (_BLOCK_BYTES // (tm * itemsize)) // 128 * 128)
        tc = min(c128, tc_budget)
    tc = max(128, _round_up(tc, 128))
    return tm, tc


def _admsloss_kernel(x_ref, lab_ref, tgt_ref, out_ref, excl_acc, *, s, m):
    j = pl.program_id(1)

    @pl.when(j == 0)
    def _init():
        excl_acc[...] = jnp.zeros_like(excl_acc)

    x = x_ref[...].astype(jnp.float32)             # (TM, TC); f32 math on all gens
    lab = lab_ref[...]                             # (TM, 1) int32 global class id
    tm, tc = x.shape

    # Masked exclusive exp-sum for this class tile.  Padded columns hold
    # _PAD_VALUE so exp(s * pad) == 0 exactly; the target column is zeroed by
    # the select (no total - exp(s*target) cancellation).
    local_lab = lab - j * tc                       # outside [0, tc) -> no match
    col = jax.lax.broadcasted_iota(jnp.int32, (tm, tc), 1)
    e = jnp.exp(s * x)
    e = jnp.where(col == local_lab, 0.0, e)
    excl_acc[...] += jnp.sum(e, axis=-1, keepdims=True)

    @pl.when(j == pl.num_programs(1) - 1)
    def _finalize():
        numerator = s * (tgt_ref[...] - m)             # target gathered in wrapper
        denominator = jnp.exp(numerator) + excl_acc[...]
        out_ref[...] = (jnp.log(denominator) - numerator).astype(out_ref.dtype)


def admsloss_forward(x, labels, *, s=30.0, m=0.4, block_rows=None, block_cols=None):
    """x: (N, C) float (f32 or bf16), labels: (N,) int.  Returns (N,) f32 loss."""
    n, c = x.shape
    labels = labels.astype(jnp.int32)
    itemsize = jnp.dtype(x.dtype).itemsize

    tm, tc = _select_tiles(n, c, itemsize, block_rows, block_cols)
    n_pad = _round_up(n, tm)
    c_pad = _round_up(c, tc)

    # Hoisted target gather (perf review item 1): one tiny XLA gather instead
    # of an in-kernel one-hot extraction + per-tile row reduce.
    target = jnp.take_along_axis(x, labels[:, None], axis=1).astype(jnp.float32)

    x_p = x
    if (n_pad, c_pad) != (n, c):
        x_p = jnp.pad(x, ((0, n_pad - n), (0, c_pad - c)),
                      constant_values=_PAD_VALUE)
    lab_p = labels
    if n_pad != n:
        lab_p = jnp.pad(lab_p, (0, n_pad - n))
        # Padded target rows get 0.0 -> denominator = exp(-s*m) > 0, finite
        # loss for padded rows (sliced off below), no -inf to trip checkers.
        target = jnp.pad(target, ((0, n_pad - n), (0, 0)))
    lab_p = lab_p.reshape(n_pad, 1)

    grid = (n_pad // tm, c_pad // tc)

    # Double-buffered x tiles dominate the VMEM footprint.
    footprint = (2 * tm * tc * itemsize          # x tiles (double-buffered)
                 + 2 * 3 * tm * 4                # labels / target / out blocks
                 + tm * 4                        # accumulator scratch
                 + (1 << 20))                    # slack
    cap = _vmem_capacity_bytes() or (128 * 1024 * 1024)
    vmem_limit = int(min(cap, max(32 * 1024 * 1024, footprint * 5 // 4)))

    out = pl.pallas_call(
        functools.partial(_admsloss_kernel, s=float(s), m=float(m)),
        out_shape=jax.ShapeDtypeStruct((n_pad, 1), jnp.float32),
        grid_spec=pltpu.PrefetchScalarGridSpec(
            num_scalar_prefetch=0,
            grid=grid,
            in_specs=[
                pl.BlockSpec((tm, tc), lambda i, j: (i, j)),   # logits tile
                pl.BlockSpec((tm, 1), lambda i, j: (i, 0)),    # labels column
                pl.BlockSpec((tm, 1), lambda i, j: (i, 0)),    # gathered target logit
            ],
            out_specs=pl.BlockSpec((tm, 1), lambda i, j: (i, 0)),
            scratch_shapes=[
                pltpu.VMEM((tm, 1), jnp.float32),   # exclusive exp-sum accumulator
            ],
        ),
        compiler_params=pltpu.CompilerParams(
            dimension_semantics=("parallel", "arbitrary"),
            vmem_limit_bytes=vmem_limit,
        ),
    )(x_p, lab_p, target)
    return out[:n, 0]


def admsloss_reference(x, labels, *, s=30.0, m=0.4):
    """Pure-JAX reference mirroring the PyTorch forward exactly."""
    x = x.astype(jnp.float32)
    n = x.shape[0]
    target = x[jnp.arange(n), labels]
    numerator = s * (target - m)
    onehot = jax.nn.one_hot(labels, x.shape[1], dtype=bool)
    excl_sum = jnp.sum(jnp.where(onehot, 0.0, jnp.exp(s * x)), axis=1)
    denominator = jnp.exp(numerator) + excl_sum
    return -(numerator - jnp.log(denominator))


if __name__ == "__main__":
    in_features = 32
    out_features = 32
    batch = 8
    s_param, m_param = 30.0, 0.4

    key = jax.random.PRNGKey(0)
    kx, kl, kw, kx2, kl2 = jax.random.split(key, 5)

    # Deterministic init for self.fc (never used in the reference forward: wf = x).
    fc_weight = jax.random.normal(kw, (out_features, in_features), jnp.float32)
    _ = fc_weight  # unused, mirrors the reference module exactly

    # Cosine-similarity-like logits in [-1, 1] so exp(s*x) stays finite.
    x = jax.random.uniform(kx, (batch, out_features), jnp.float32,
                           minval=-1.0, maxval=1.0)
    labels = jax.random.randint(kl, (batch,), 0, out_features, jnp.int32)

    loss = jax.block_until_ready(admsloss_forward(x, labels, s=s_param, m=m_param))
    ref = admsloss_reference(x, labels, s=s_param, m=m_param)
    assert loss.shape == (batch,)
    assert jnp.all(jnp.isfinite(loss)), loss
    assert jnp.allclose(loss, ref, rtol=1e-4, atol=1e-5), (loss, ref)

    # Second check: ragged N / C and a multi-tile class reduction (tiny forced
    # tiles exercise padding, accumulator init/finalize, and the 2-D grid).
    n2, c2 = 20, 300
    x2 = jax.random.uniform(kx2, (n2, c2), jnp.float32, minval=-1.0, maxval=1.0)
    labels2 = jax.random.randint(kl2, (n2,), 0, c2, jnp.int32)
    loss2 = jax.block_until_ready(
        admsloss_forward(x2, labels2, s=s_param, m=m_param,
                         block_rows=8, block_cols=128))
    ref2 = admsloss_reference(x2, labels2, s=s_param, m=m_param)
    assert loss2.shape == (n2,)
    assert jnp.all(jnp.isfinite(loss2)), loss2
    assert jnp.allclose(loss2, ref2, rtol=1e-4, atol=1e-5), (loss2, ref2)

    print("KERNEL_OK")
</pallas_src>

<mosaic_0001>
module attributes {stable_mosaic.version = 11 : i64} {
  func.func @_admsloss_kernel(%arg0: i32, %arg1: i32, %arg2: memref<8x128xf32, #tpu.memory_space<vmem>>, %arg3: memref<8x1xi32, #tpu.memory_space<vmem>>, %arg4: memref<8x1xf32, #tpu.memory_space<vmem>>, %arg5: memref<8x1xf32, #tpu.memory_space<vmem>>, %arg6: memref<8x1xf32, #tpu.memory_space<vmem>>) attributes {dimension_semantics = [#tpu.dimension_semantics<parallel>, #tpu.dimension_semantics<arbitrary>], iteration_bounds = array<i64: 1, 1>, scalar_prefetch = 0 : i64, scratch_operands = 1 : i64, tpu.core_type = #tpu.core_type<tc>, window_params = [{transform_indices = @transform_0, window_bounds = array<i64: 8, 128>}, {transform_indices = @transform_1, window_bounds = array<i64: 8, 1>}, {transform_indices = @transform_2, window_bounds = array<i64: 8, 1>}, {transform_indices = @transform_3, window_bounds = array<i64: 8, 1>}]} {
    %c0_i32 = arith.constant 0 : i32
    %0 = arith.cmpi eq, %arg1, %c0_i32 : i32
    %1 = arith.extui %0 : i1 to i32
    %c0_i32_0 = arith.constant 0 : i32
    %2 = arith.cmpi ne, %1, %c0_i32_0 : i32
    scf.if %2 {
      %cst_12 = arith.constant 0.000000e+00 : f32
      %24 = vector.broadcast %cst_12 : f32 to vector<8x1xf32>
      %c0_13 = arith.constant 0 : index
      %c0_14 = arith.constant 0 : index
      %25 = vector.load %arg6[%c0_13, %c0_14] : memref<8x1xf32, #tpu.memory_space<vmem>>, vector<8x1xf32>
      tpu.vector_store %arg6[%c0_13, %c0_14], %24 {strides = array<i32>} : memref<8x1xf32, #tpu.memory_space<vmem>>, vector<8x1xf32>,
    } else {
    }
    %c0 = arith.constant 0 : index
    %c0_1 = arith.constant 0 : index
    %3 = vector.load %arg2[%c0, %c0_1] : memref<8x128xf32, #tpu.memory_space<vmem>>, vector<8x128xf32>
    %c0_2 = arith.constant 0 : index
    %c0_3 = arith.constant 0 : index
    %4 = vector.load %arg3[%c0_2, %c0_3] : memref<8x1xi32, #tpu.memory_space<vmem>>, vector<8x1xi32>
    %c128_i32 = arith.constant 128 : i32
    %5 = arith.muli %arg1, %c128_i32 : i32
    %6 = vector.broadcast %5 : i32 to vector<8x1xi32>
    %7 = arith.subi %4, %6 : vector<8x1xi32>
    %8 = tpu.iota {dimensions = array<i32: 1>} : vector<8x128xi32>
    %cst = arith.constant 3.000000e+01 : f32
    %9 = vector.broadcast %cst : f32 to vector<8x128xf32>
    %10 = arith.mulf %9, %3 : vector<8x128xf32>
    %11 = math.exp %10 : vector<8x128xf32>
    %12 = vector.broadcast %7 : vector<8x1xi32> to vector<8x128xi32>
    %13 = arith.cmpi eq, %8, %12 : vector<8x128xi32>
    %cst_4 = arith.constant 0.000000e+00 : f32
    %14 = vector.broadcast %cst_4 : f32 to vector<8x128xf32>
    %15 = arith.select %13, %14, %11 : vector<8x128xi1>, vector<8x128xf32>
    %c0_5 = arith.constant 0 : index
    %c0_6 = arith.constant 0 : index
    %16 = vector.load %arg6[%c0_5, %c0_6] : memref<8x1xf32, #tpu.memory_space<vmem>>, vector<8x1xf32>
    %cst_7 = arith.constant dense<0.000000e+00> : vector<8xf32>
    %17 = vector.multi_reduction <add>, %15, %cst_7 [1] : vector<8x128xf32> to vector<8xf32>
    %18 = vector.shape_cast %17 : vector<8xf32> to vector<8x1xf32>
    %19 = arith.addf %16, %18 : vector<8x1xf32>
    %c0_8 = arith.constant 0 : index
    %c0_9 = arith.constant 0 : index
    %20 = vector.load %arg6[%c0_8, %c0_9] : memref<8x1xf32, #tpu.memory_space<vmem>>, vector<8x1xf32>
    tpu.vector_store %arg6[%c0_8, %c0_9], %19 {strides = array<i32>} : memref<8x1xf32, #tpu.memory_space<vmem>>, vector<8x1xf32>,
    %c0_i32_10 = arith.constant 0 : i32
    %21 = arith.cmpi eq, %arg1, %c0_i32_10 : i32
    %22 = arith.extui %21 : i1 to i32
    %c0_i32_11 = arith.constant 0 : i32
    %23 = arith.cmpi ne, %22, %c0_i32_11 : i32
    scf.if %23 {
      %c0_12 = arith.constant 0 : index
      %c0_13 = arith.constant 0 : index
      %24 = vector.load %arg4[%c0_12, %c0_13] : memref<8x1xf32, #tpu.memory_space<vmem>>, vector<8x1xf32>
      %cst_14 = arith.constant 4.000000e-01 : f32
      %25 = vector.broadcast %cst_14 : f32 to vector<8x1xf32>
      %26 = arith.subf %24, %25 : vector<8x1xf32>
      %cst_15 = arith.constant 3.000000e+01 : f32
      %27 = vector.broadcast %cst_15 : f32 to vector<8x1xf32>
      %28 = arith.mulf %27, %26 : vector<8x1xf32>
      %29 = math.exp %28 : vector<8x1xf32>
      %c0_16 = arith.constant 0 : index
      %c0_17 = arith.constant 0 : index
      %30 = vector.load %arg6[%c0_16, %c0_17] : memref<8x1xf32, #tpu.memory_space<vmem>>, vector<8x1xf32>
      %31 = arith.addf %29, %30 : vector<8x1xf32>
      %32 = math.log %31 : vector<8x1xf32>
      %33 = arith.subf %32, %28 : vector<8x1xf32>
      %c0_18 = arith.constant 0 : index
      %c0_19 = arith.constant 0 : index
      %34 = vector.load %arg5[%c0_18, %c0_19] : memref<8x1xf32, #tpu.memory_space<vmem>>, vector<8x1xf32>
      tpu.vector_store %arg5[%c0_18, %c0_19], %33 {strides = array<i32>} : memref<8x1xf32, #tpu.memory_space<vmem>>, vector<8x1xf32>,
    } else {
    }
    return
  }
  func.func @transform_0(%arg0: i32, %arg1: i32) -> (i32, i32) {
    %c0_i32 = arith.constant 0 : i32
    return %arg0, %arg1 : i32, i32
  }
  func.func @transform_1(%arg0: i32, %arg1: i32) -> (i32, i32) {
    %c0_i32 = arith.constant 0 : i32
    %c0_i32_0 = arith.constant 0 : i32
    return %arg0, %c0_i32 : i32, i32
  }
  func.func @transform_2(%arg0: i32, %arg1: i32) -> (i32, i32) {
    %c0_i32 = arith.constant 0 : i32
    %c0_i32_0 = arith.constant 0 : i32
    return %arg0, %c0_i32 : i32, i32
  }
  func.func @transform_3(%arg0: i32, %arg1: i32) -> (i32, i32) {
    %c0_i32 = arith.constant 0 : i32
    %c0_i32_0 = arith.constant 0 : i32
    return %arg0, %c0_i32 : i32, i32
  }
}

</mosaic_0001>

<llo_original>
// kernel: tpu_custom_call.1
$region0: #{tpu_custom_call.1}
  #allocation0 [shape = 'u32[]', space=smem, size = 0x4, offset = 0x4, fixed_abs, tag = 'smem constant byte address 0x4 - core index']
  #allocation1 [shape = 'u32[144,128]{1,0:T(1,128)}', space=vmem, size = 0x12000, scoped, tag = 'internal scratch']
  #allocation2 [shape = 'f32[8,1]{1,0:T(8,128)}', space=vmem, size = 0x1000, scoped, tag = 'scratch operand']
  %s0 = inlined_call_operand.vmem [shape: f32[8,128], index: 0, kind: input, shape index: {}]
  %s1 = inlined_call_operand.vmem [shape: s32[8,1], index: 1, kind: input, shape index: {}]
  %s2 = inlined_call_operand.vmem [shape: f32[8,1], index: 2, kind: input, shape index: {}]
  %s3 = inlined_call_operand.vmem [shape: f32[8,1], index: 3, kind: output, shape index: {}]
  %s4 = sld [smem:[#allocation0]]
  $region30: #{tpu_custom_call.1} parent=0
    _
  %s6 = ssub.s32 1, %s4
  %s7 = scalar_select 0, %s6, %s4
  // Predicated region
  $region2: #{tpu_custom_call.1} parent=0 // pred_check
    _
  $region3: #{tpu_custom_call.1} parent=0 // pred_check_branch
    %9 = sbr.rel (0) target = $region5
  $region4: #{tpu_custom_call.1} parent=0 // pred_region
    _
  $region5: #{tpu_custom_call.1} parent=0 // pred_fallthru
    _
  // Predicated region
  $region6: #{tpu_custom_call.1} parent=0 // pred_check
    _
  $region7: #{tpu_custom_call.1} parent=0 // pred_check_branch
    %11 = sbr.rel (0) target = $region9
  $region8: #{tpu_custom_call.1} parent=0 // pred_region
    _
  $region9: #{tpu_custom_call.1} parent=0 // pred_fallthru
    _
  // Predicated region
  $region10: #{tpu_custom_call.1} parent=0 // pred_check
    _
  $region11: #{tpu_custom_call.1} parent=0 // pred_check_branch
    %13 = sbr.rel (0) target = $region13
  $region12: #{tpu_custom_call.1} parent=0 // pred_region
    _
  $region13: #{tpu_custom_call.1} parent=0 // pred_fallthru
    _
  %p14 = scmp.eq.s32.totalorder 0, 0
  // Predicated region
  $region14: #{tpu_custom_call.1} parent=0 // pred_check
    %p15 = pneg %p14
  $region15: #{tpu_custom_call.1} parent=0 // pred_check_branch
    %17 = sbr.rel (%p15) target = $region17
  $region16: #{tpu_custom_call.1} parent=0 // pred_region
    %vm18 = vcmask 7168
    %19 = vst.msk [vmem:[#allocation2] sm:$0xff] %vm18, 0.0
  $region17: #{tpu_custom_call.1} parent=0 // pred_fallthru
    _
  %v20 = vld [vmem:[%s0] sm:$0xff]
  %v21 = vld [vmem:[%s1] sm:$0xff]
  %s22 = smul.u32 0, 128
  %v23 = vstv %s22
  %v24 = vsub.s32 %v21, %v23
  %v25 = vlaneseq
  %v26 = vand.u32 %v25, 127
  %v27 = vmul.f32 %v20, 30.0
  %v28 = vmul.f32 %v27, 1.442695
  %v29 = vpow.pop %v28
  %30 = vset.pattern.permute.xlu0 0
  %31 = vperm.xlu0 %30, %v24
  %v32 = vpop.permute.xlu0 %31
  %vm33 = vcmp.eq.s32.totalorder %v26, %v32
  %v34 = vsel %vm33, 0.0, %v29
  %v35 = vld [vmem:[#allocation2] sm:$0xff]
  %36 = vadd.xlane.f32.xlu0 %v34
  %v37 = vpop.xlane.xlu0 %36
  %v38 = vadd.f32 %v35, %v37
  %vm39 = vcmask 7168
  %40 = vst.msk [vmem:[#allocation2] sm:$0xff] %vm39, %v38
  // Predicated region
  $region18: #{tpu_custom_call.1} parent=0 // pred_check
    %p41 = pneg %p14
  $region19: #{tpu_custom_call.1} parent=0 // pred_check_branch
    %43 = sbr.rel (%p41) target = $region21
  $region20: #{tpu_custom_call.1} parent=0 // pred_region
    %v44 = vld [vmem:[%s2] sm:$0xff]
    %v45 = vsub.f32 %v44, 0.4
    %v46 = vmul.f32 %v45, 30.0
    %v47 = vmul.f32 %v46, 1.442695
    %v48 = vpow.pop %v47
    %v49 = vld [vmem:[#allocation2] sm:$0xff]
    %v50 = vadd.f32 %v48, %v49
    %v51 = vlog2.pop %v50
    %v52 = vmul.f32 %v51, 0.6931472
    %v53 = vsub.f32 %v52, %v46
    %54 = vst.msk [vmem:[%s3] sm:$0xff] %vm39, %v53
  $region21: #{tpu_custom_call.1} parent=0 // pred_fallthru
    _
  // Predicated region
  $region22: #{tpu_custom_call.1} parent=0 // pred_check
    _
  $region23: #{tpu_custom_call.1} parent=0 // pred_check_branch
    %56 = sbr.rel (0) target = $region25
  $region24: #{tpu_custom_call.1} parent=0 // pred_region
    _
  $region25: #{tpu_custom_call.1} parent=0 // pred_fallthru
    _
  // Predicated region
  $region26: #{tpu_custom_call.1} parent=0 // pred_check
    _
  $region27: #{tpu_custom_call.1} parent=0 // pred_check_branch
    %58 = sbr.rel (0) target = $region29
  $region28: #{tpu_custom_call.1} parent=0 // pred_region
    _
  $region29: #{tpu_custom_call.1} parent=0 // pred_fallthru
    _

</llo_original>
